<compile_context>
chip_gen: v5e
topology: v5e:2x2
jax: 0.10.0
libtpu: 0.0.40
codegen_flags: <defaults>
</compile_context>

<pallas_src>
import math
import functools

import jax
import jax.numpy as jnp
from jax.experimental import pallas as pl
from jax.experimental.pallas import tpu as pltpu


def _round_up(x, m):
    return ((x + m - 1) // m) * m


def _linear_kernel(x_ref, w_ref, b_ref, o_ref, acc_ref):
    # x_ref: (tm, tk)  w_ref: (tk, tn)  b_ref: (1, tn)  o_ref: (tm, tn)
    # acc_ref: (tm, tn) f32 scratch, resident across the K grid axis.
    k = pl.program_id(2)

    @pl.when(k == 0)
    def _():
        acc_ref[...] = jnp.zeros_like(acc_ref)

    acc_ref[...] += jnp.dot(
        x_ref[...], w_ref[...], preferred_element_type=jnp.float32
    )

    @pl.when(k == pl.num_programs(2) - 1)
    def _():
        o_ref[...] = (acc_ref[...] + b_ref[...].astype(jnp.float32)).astype(
            o_ref.dtype
        )


@functools.partial(
    jax.jit, static_argnames=("compute_dtype", "tm", "tn", "tk")
)
def generator_forward(
    x,
    w_t,
    b,
    *,
    compute_dtype=jnp.bfloat16,
    tm=256,
    tn=512,
    tk=512,
):
    """x: [batch, seq, d_model]; w_t: [d_model, vocab]; b: [vocab]."""
    batch, seq, d_model = x.shape
    vocab = w_t.shape[1]
    m = batch * seq
    out_dtype = x.dtype

    # --- tile sizing -------------------------------------------------------
    # Lane dims (tk, tn) must be multiples of 128; sublane dim (tm) multiple
    # of 8.  Clamp the requested tiles to the (padded) problem size so small
    # shapes don't over-allocate.
    tm = min(tm, _round_up(m, 8))
    tn = min(tn, _round_up(vocab, 128))
    tk = min(tk, _round_up(d_model, 128))

    m_p = _round_up(m, tm)
    n_p = _round_up(vocab, tn)
    k_p = _round_up(d_model, tk)

    # --- prepare operands (cast + zero-pad to tile multiples) --------------
    x2d = x.reshape(m, d_model).astype(compute_dtype)
    w2d = w_t.astype(compute_dtype)
    b2d = b.reshape(1, vocab).astype(jnp.float32)

    if (m_p, k_p) != (m, d_model):
        x2d = jnp.pad(x2d, ((0, m_p - m), (0, k_p - d_model)))
    if (k_p, n_p) != (d_model, vocab):
        w2d = jnp.pad(w2d, ((0, k_p - d_model), (0, n_p - vocab)))
    if n_p != vocab:
        b2d = jnp.pad(b2d, ((0, 0), (0, n_p - vocab)))

    grid = (m_p // tm, n_p // tn, k_p // tk)

    bytes_in = jnp.dtype(compute_dtype).itemsize
    bytes_out = jnp.dtype(out_dtype).itemsize
    cost = pl.CostEstimate(
        flops=2 * m_p * k_p * n_p,
        transcendentals=0,
        bytes_accessed=(
            m_p * k_p * bytes_in + k_p * n_p * bytes_in + m_p * n_p * bytes_out
        ),
    )

    y2d = pl.pallas_call(
        _linear_kernel,
        out_shape=jax.ShapeDtypeStruct((m_p, n_p), out_dtype),
        grid_spec=pltpu.PrefetchScalarGridSpec(
            num_scalar_prefetch=0,
            grid=grid,
            in_specs=[
                pl.BlockSpec((tm, tk), lambda i, j, k: (i, k)),
                pl.BlockSpec((tk, tn), lambda i, j, k: (k, j)),
                pl.BlockSpec((1, tn), lambda i, j, k: (0, j)),
            ],
            out_specs=pl.BlockSpec((tm, tn), lambda i, j, k: (i, j)),
            scratch_shapes=[pltpu.VMEM((tm, tn), jnp.float32)],
        ),
        compiler_params=pltpu.CompilerParams(
            dimension_semantics=("parallel", "parallel", "arbitrary"),
        ),
        cost_estimate=cost,
    )(x2d, w2d, b2d)

    y = y2d[:m, :vocab].reshape(batch, seq, vocab)
    # PyTorch .squeeze(-1): only squeezes when last dim == 1, otherwise no-op.
    if vocab == 1:
        y = jnp.squeeze(y, axis=-1)
    return y


def init_generator_params(key, d_model, vocab, dtype=jnp.float32):
    # Deterministic init mirroring nn.Linear's default
    # U(-1/sqrt(fan_in), 1/sqrt(fan_in)).
    kw, kb = jax.random.split(key)
    bound = 1.0 / math.sqrt(d_model)
    # PyTorch weight is [vocab, d_model]; we store its transpose [d_model, vocab].
    w_t = jax.random.uniform(kw, (d_model, vocab), dtype, minval=-bound, maxval=bound)
    b = jax.random.uniform(kb, (vocab,), dtype, minval=-bound, maxval=bound)
    return w_t, b


if __name__ == "__main__":
    key = jax.random.PRNGKey(0)
    k_x, k_p = jax.random.split(key)

    batch, seq, d_model, vocab = 2, 8, 32, 16
    x = jax.random.normal(k_x, (batch, seq, d_model), dtype=jnp.float32)
    w_t, b = init_generator_params(k_p, d_model, vocab)

    y = generator_forward(x, w_t, b)
    y = jax.block_until_ready(y)

    # Reference check in plain JAX with the same bf16-input / f32-accum recipe.
    xb = x.astype(jnp.bfloat16)
    wb = w_t.astype(jnp.bfloat16)
    y_ref = (
        jnp.dot(xb, wb, preferred_element_type=jnp.float32) + b
    ).astype(x.dtype)
    # Loose check against the pure-f32 reference as well.
    y_ref_f32 = x @ w_t + b

    assert y.shape == (batch, seq, vocab), y.shape
    assert jnp.allclose(y, y_ref, atol=1e-3, rtol=1e-3)
    assert jnp.allclose(y, y_ref_f32, atol=2e-2, rtol=2e-2)

    print("KERNEL_OK")
</pallas_src>

<mosaic_0001>
module attributes {stable_mosaic.version = 11 : i64} {
  func.func @_linear_kernel(%arg0: i32, %arg1: i32, %arg2: i32, %arg3: memref<16x128xbf16, #tpu.memory_space<vmem>>, %arg4: memref<128x128xbf16, #tpu.memory_space<vmem>>, %arg5: memref<1x128xf32, #tpu.memory_space<vmem>>, %arg6: memref<16x128xf32, #tpu.memory_space<vmem>>, %arg7: memref<16x128xf32, #tpu.memory_space<vmem>>) attributes {dimension_semantics = [#tpu.dimension_semantics<parallel>, #tpu.dimension_semantics<parallel>, #tpu.dimension_semantics<arbitrary>], iteration_bounds = array<i64: 1, 1, 1>, scalar_prefetch = 0 : i64, scratch_operands = 1 : i64, tpu.core_type = #tpu.core_type<tc>, window_params = [{transform_indices = @transform_0, window_bounds = array<i64: 16, 128>}, {transform_indices = @transform_1, window_bounds = array<i64: 128, 128>}, {transform_indices = @transform_2, window_bounds = array<i64: 1, 128>}, {transform_indices = @transform_3, window_bounds = array<i64: 16, 128>}]} {
    %c0_i32 = arith.constant 0 : i32
    %0 = arith.cmpi eq, %arg2, %c0_i32 : i32
    %1 = arith.extui %0 : i1 to i32
    %c0_i32_0 = arith.constant 0 : i32
    %2 = arith.cmpi ne, %1, %c0_i32_0 : i32
    scf.if %2 {
      %cst_10 = arith.constant 0.000000e+00 : f32
      %12 = vector.broadcast %cst_10 : f32 to vector<16x128xf32>
      %c0_11 = arith.constant 0 : index
      %c0_12 = arith.constant 0 : index
      %13 = vector.load %arg7[%c0_11, %c0_12] : memref<16x128xf32, #tpu.memory_space<vmem>>, vector<16x128xf32>
      tpu.vector_store %arg7[%c0_11, %c0_12], %12 {strides = array<i32>} : memref<16x128xf32, #tpu.memory_space<vmem>>, vector<16x128xf32>,
    } else {
    }
    %c0 = arith.constant 0 : index
    %c0_1 = arith.constant 0 : index
    %3 = vector.load %arg7[%c0, %c0_1] : memref<16x128xf32, #tpu.memory_space<vmem>>, vector<16x128xf32>
    %c0_2 = arith.constant 0 : index
    %c0_3 = arith.constant 0 : index
    %4 = vector.load %arg3[%c0_2, %c0_3] : memref<16x128xbf16, #tpu.memory_space<vmem>>, vector<16x128xbf16>
    %c0_4 = arith.constant 0 : index
    %c0_5 = arith.constant 0 : index
    %5 = vector.load %arg4[%c0_4, %c0_5] : memref<128x128xbf16, #tpu.memory_space<vmem>>, vector<128x128xbf16>
    %cst = arith.constant dense<0.000000e+00> : vector<16x128xf32>
    %6 = tpu.matmul %4, %5, %cst {dimension_numbers = #tpu.dot_dimension_numbers<[1], [0], [0], [1], [0, 0, 1, 1], [], []>} : vector<16x128xbf16>, vector<128x128xbf16>, vector<16x128xf32> -> vector<16x128xf32>
    %7 = arith.addf %3, %6 : vector<16x128xf32>
    %c0_6 = arith.constant 0 : index
    %c0_7 = arith.constant 0 : index
    %8 = vector.load %arg7[%c0_6, %c0_7] : memref<16x128xf32, #tpu.memory_space<vmem>>, vector<16x128xf32>
    tpu.vector_store %arg7[%c0_6, %c0_7], %7 {strides = array<i32>} : memref<16x128xf32, #tpu.memory_space<vmem>>, vector<16x128xf32>,
    %c0_i32_8 = arith.constant 0 : i32
    %9 = arith.cmpi eq, %arg2, %c0_i32_8 : i32
    %10 = arith.extui %9 : i1 to i32
    %c0_i32_9 = arith.constant 0 : i32
    %11 = arith.cmpi ne, %10, %c0_i32_9 : i32
    scf.if %11 {
      %c0_10 = arith.constant 0 : index
      %c0_11 = arith.constant 0 : index
      %12 = vector.load %arg7[%c0_10, %c0_11] : memref<16x128xf32, #tpu.memory_space<vmem>>, vector<16x128xf32>
      %c0_12 = arith.constant 0 : index
      %c0_13 = arith.constant 0 : index
      %13 = vector.load %arg5[%c0_12, %c0_13] : memref<1x128xf32, #tpu.memory_space<vmem>>, vector<1x128xf32>
      %14 = vector.broadcast %13 : vector<1x128xf32> to vector<16x128xf32>
      %15 = arith.addf %12, %14 : vector<16x128xf32>
      %c0_14 = arith.constant 0 : index
      %c0_15 = arith.constant 0 : index
      %16 = vector.load %arg6[%c0_14, %c0_15] : memref<16x128xf32, #tpu.memory_space<vmem>>, vector<16x128xf32>
      tpu.vector_store %arg6[%c0_14, %c0_15], %15 {strides = array<i32>} : memref<16x128xf32, #tpu.memory_space<vmem>>, vector<16x128xf32>,
    } else {
    }
    return
  }
  func.func @transform_0(%arg0: i32, %arg1: i32, %arg2: i32) -> (i32, i32) {
    %c0_i32 = arith.constant 0 : i32
    return %arg0, %arg2 : i32, i32
  }
  func.func @transform_1(%arg0: i32, %arg1: i32, %arg2: i32) -> (i32, i32) {
    %c0_i32 = arith.constant 0 : i32
    return %arg2, %arg1 : i32, i32
  }
  func.func @transform_2(%arg0: i32, %arg1: i32, %arg2: i32) -> (i32, i32) {
    %c0_i32 = arith.constant 0 : i32
    %c0_i32_0 = arith.constant 0 : i32
    return %c0_i32, %arg1 : i32, i32
  }
  func.func @transform_3(%arg0: i32, %arg1: i32, %arg2: i32) -> (i32, i32) {
    %c0_i32 = arith.constant 0 : i32
    return %arg0, %arg1 : i32, i32
  }
}

</mosaic_0001>

<llo_original>
// kernel: generator_forward.1
$region0: #{generator_forward.1}
  #allocation0 [shape = 'u32[]', space=smem, size = 0x4, offset = 0x4, fixed_abs, tag = 'smem constant byte address 0x4 - core index']
  #allocation1 [shape = 'u32[72,128]{1,0:T(1,128)}', space=vmem, size = 0x9000, scoped, tag = 'internal scratch']
  #allocation2 [shape = 'f32[16,128]{1,0:T(8,128)}', space=vmem, size = 0x2000, scoped, tag = 'scratch operand']
  %s0 = inlined_call_operand.vmem [shape: bf16[16,128], index: 0, kind: input, shape index: {}]
  %s1 = inlined_call_operand.vmem [shape: bf16[128,128], index: 1, kind: input, shape index: {}]
  %s2 = inlined_call_operand.vmem [shape: f32[1,128], index: 2, kind: input, shape index: {}]
  %s3 = inlined_call_operand.vmem [shape: f32[16,128], index: 3, kind: output, shape index: {}]
  %s4 = sld [smem:[#allocation0]]
  $region30: #{generator_forward.1} parent=0
    _
  %s6 = ssub.s32 1, %s4
  %s7 = scalar_select 0, %s6, %s4
  // Predicated region
  $region2: #{generator_forward.1} parent=0 // pred_check
    _
  $region3: #{generator_forward.1} parent=0 // pred_check_branch
    %9 = sbr.rel (0) target = $region5
  $region4: #{generator_forward.1} parent=0 // pred_region
    _
  $region5: #{generator_forward.1} parent=0 // pred_fallthru
    _
  // Predicated region
  $region6: #{generator_forward.1} parent=0 // pred_check
    _
  $region7: #{generator_forward.1} parent=0 // pred_check_branch
    %11 = sbr.rel (0) target = $region9
  $region8: #{generator_forward.1} parent=0 // pred_region
    _
  $region9: #{generator_forward.1} parent=0 // pred_fallthru
    _
  // Predicated region
  $region10: #{generator_forward.1} parent=0 // pred_check
    _
  $region11: #{generator_forward.1} parent=0 // pred_check_branch
    %13 = sbr.rel (0) target = $region13
  $region12: #{generator_forward.1} parent=0 // pred_region
    _
  $region13: #{generator_forward.1} parent=0 // pred_fallthru
    _
  %p14 = scmp.eq.s32.totalorder 0, 0
  // Predicated region
  $region14: #{generator_forward.1} parent=0 // pred_check
    %p15 = pneg %p14
  $region15: #{generator_forward.1} parent=0 // pred_check_branch
    %17 = sbr.rel (%p15) target = $region17
  $region16: #{generator_forward.1} parent=0 // pred_region
    %18 = vst [vmem:[#allocation2] sm:$0xff] 0.0
    %19 = vst [vmem:[#allocation2 + $0x8] sm:$0xff] 0.0
  $region17: #{generator_forward.1} parent=0 // pred_fallthru
    _
  %v20 = vld [vmem:[#allocation2] sm:$0xff]
  %v21 = vld [vmem:[#allocation2 + $0x8] sm:$0xff]
  %v22 = vld [vmem:[%s0] sm:$0xf]
  %v23 = vld [vmem:[%s0 + $0x4] sm:$0xf]
  %v24 = vld [vmem:[%s1] sm:$0xf]
  %v25 = vld [vmem:[%s1 + $0x4] sm:$0xf]
  %v26 = vld [vmem:[%s1 + $0x8] sm:$0xf]
  %v27 = vld [vmem:[%s1 + $0xc] sm:$0xf]
  %v28 = vld [vmem:[%s1 + $0x10] sm:$0xf]
  %v29 = vld [vmem:[%s1 + $0x14] sm:$0xf]
  %v30 = vld [vmem:[%s1 + $0x18] sm:$0xf]
  %v31 = vld [vmem:[%s1 + $0x1c] sm:$0xf]
  %v32 = vld [vmem:[%s1 + $0x20] sm:$0xf]
  %v33 = vld [vmem:[%s1 + $0x24] sm:$0xf]
  %v34 = vld [vmem:[%s1 + $0x28] sm:$0xf]
  %v35 = vld [vmem:[%s1 + $0x2c] sm:$0xf]
  %v36 = vld [vmem:[%s1 + $0x30] sm:$0xf]
  %v37 = vld [vmem:[%s1 + $0x34] sm:$0xf]
  %v38 = vld [vmem:[%s1 + $0x38] sm:$0xf]
  %v39 = vld [vmem:[%s1 + $0x3c] sm:$0xf]
  %v42 = vunpack.c.l.b16 %v22
  %v43 = vunpack.c.l.b16 %v23
  %v44 = vpack.c.b16 %v43, %v42
  %v62 = vunpack.c.l.b16 %v24
  %v63 = vunpack.c.l.b16 %v25
  %v64 = vunpack.c.l.b16 %v26
  %v65 = vunpack.c.l.b16 %v27
  %v66 = vunpack.c.l.b16 %v28
  %v67 = vunpack.c.l.b16 %v29
  %v68 = vunpack.c.l.b16 %v30
  %v69 = vunpack.c.l.b16 %v31
  %v70 = vunpack.c.l.b16 %v32
  %v71 = vunpack.c.l.b16 %v33
  %v72 = vunpack.c.l.b16 %v34
  %v73 = vunpack.c.l.b16 %v35
  %v74 = vunpack.c.l.b16 %v36
  %v75 = vunpack.c.l.b16 %v37
  %v76 = vunpack.c.l.b16 %v38
  %v77 = vunpack.c.l.b16 %v39
  %v78 = vpack.c.b16 %v63, %v62
  %v79 = vpack.c.b16 %v65, %v64
  %v80 = vpack.c.b16 %v67, %v66
  %v81 = vpack.c.b16 %v69, %v68
  %v82 = vpack.c.b16 %v71, %v70
  %v83 = vpack.c.b16 %v73, %v72
  %v84 = vpack.c.b16 %v75, %v74
  %v85 = vpack.c.b16 %v77, %v76
  %94 = vmatpush.bf16.msra.mxu0 %v85
  %95 = vmatpush.bf16.msra.mxu0 %v84
  %96 = vmatpush.bf16.msra.mxu0 %v83
  %97 = vmatpush.bf16.msra.mxu0 %v82
  %98 = vmatpush.bf16.msra.mxu0 %v81
  %99 = vmatpush.bf16.msra.mxu0 %v80
  %100 = vmatpush.bf16.msra.mxu0 %v79
  %101 = vmatpush.bf16.msra.mxu0 %v78
  %102 = vmatmul.bf16.gmra.mxu0 %v44
  %v103 = vpop.f32.mrf.mxu0
  %v104 = vadd.f32 0.0, %v103
  %v105 = vpop.f32.mrf.mxu0
  %v106 = vadd.f32 0.0, %v105
  %107 = vdwg.mxu0
  %v108 = vadd.f32 %v20, %v104
  %v109 = vadd.f32 %v21, %v106
  %110 = vst [vmem:[#allocation2] sm:$0xff] %v108
  %111 = vst [vmem:[#allocation2 + $0x8] sm:$0xff] %v109
  // Predicated region
  $region18: #{generator_forward.1} parent=0 // pred_check
    %p112 = pneg %p14
  $region19: #{generator_forward.1} parent=0 // pred_check_branch
    %114 = sbr.rel (%p112) target = $region21
  $region20: #{generator_forward.1} parent=0 // pred_region
    %v115 = vld [vmem:[#allocation2] sm:$0xff]
    %v116 = vld [vmem:[#allocation2 + $0x8] sm:$0xff]
    %v117 = vld [vmem:[%s2] sm:$0x1]
    %v119 = vperm.slane %v117, 0
    %v121 = vadd.f32 %v115, %v119
    %v122 = vadd.f32 %v116, %v119
    %123 = vst [vmem:[%s3] sm:$0xff] %v121
    %124 = vst [vmem:[%s3 + $0x8] sm:$0xff] %v122
  $region21: #{generator_forward.1} parent=0 // pred_fallthru
    _
  // Predicated region
  $region22: #{generator_forward.1} parent=0 // pred_check
    _
  $region23: #{generator_forward.1} parent=0 // pred_check_branch
    %126 = sbr.rel (0) target = $region25
  $region24: #{generator_forward.1} parent=0 // pred_region
    _
  $region25: #{generator_forward.1} parent=0 // pred_fallthru
    _
  // Predicated region
  $region26: #{generator_forward.1} parent=0 // pred_check
    _
  $region27: #{generator_forward.1} parent=0 // pred_check_branch
    %128 = sbr.rel (0) target = $region29
  $region28: #{generator_forward.1} parent=0 // pred_region
    _
  $region29: #{generator_forward.1} parent=0 // pred_fallthru
    _

</llo_original>
